<compile_context>
chip_gen: v7x
topology: tpu7x:2x2x1
jax: 0.10.0
libtpu: 0.0.40
codegen_flags: <defaults>
</compile_context>

<pallas_src>
import math

import numpy as np
import jax
import jax.numpy as jnp
from jax.experimental import pallas as pl
from jax.experimental.pallas import tpu as pltpu

FREQ_EMB_SIZE = 256          # frequency_embedding_size (even -> no zero-pad branch)
HIDDEN_SIZE = 128            # hidden_size
MAX_PERIOD = 10000.0
_HALF = FREQ_EMB_SIZE // 2


# --------------------------------------------------------------------------- #
# Kernel
# --------------------------------------------------------------------------- #
def _make_kernel(merge_k1: bool):
    """merge_k1=True: single K=256 matmul (v6e/v7x). False: split-K 2x128 (v5e)."""

    def kernel(t_ref, freqs_ref, w1_ref, b1_ref, w2_ref, b2_ref, out_ref):
        # --- sinusoidal timestep embedding (f32 args: range up to ~1e3 rad) ---
        t = t_ref[...]                                   # (tn, 1) f32
        args = t * freqs_ref[...]                        # (tn, 128) f32
        cos_e = jnp.cos(args).astype(jnp.bfloat16)       # bf16 MXU operands
        sin_e = jnp.sin(args).astype(jnp.bfloat16)

        # --- Linear 1 (bf16 operands, f32 accumulation) ---
        if merge_k1:
            emb = jnp.concatenate([cos_e, sin_e], axis=-1)        # lane-aligned concat
            h = jnp.dot(emb, w1_ref[...], preferred_element_type=jnp.float32)
        else:
            h = jnp.dot(cos_e, w1_ref[:_HALF, :], preferred_element_type=jnp.float32)
            h = h + jnp.dot(sin_e, w1_ref[_HALF:, :], preferred_element_type=jnp.float32)
        h = h + b1_ref[...]                              # f32 bias

        # --- SiLU: x * sigmoid(x) via approx EUP reciprocal ---
        h = h * pl.reciprocal(1.0 + jnp.exp(-h), approx=True)

        # --- Linear 2 ---
        out = jnp.dot(h.astype(jnp.bfloat16), w2_ref[...],
                      preferred_element_type=jnp.float32)
        out_ref[...] = (out + b2_ref[...]).astype(out_ref.dtype)

    return kernel


# --------------------------------------------------------------------------- #
# Tiling / VMEM sizing helpers
# --------------------------------------------------------------------------- #
def _tpu_generation():
    try:
        kind = jax.devices()[0].device_kind.lower()
    except Exception:
        return None
    if "v5" in kind:
        return "v5"
    if "v6" in kind:
        return "v6"
    if "v7" in kind or "7x" in kind:
        return "v7"
    return None


def _round_up(x, m):
    return ((x + m - 1) // m) * m


_WEIGHT_VMEM_BYTES = 2 * (  # double-buffered resident inputs (bf16 weights, f32 bias/freqs)
    (FREQ_EMB_SIZE * HIDDEN_SIZE + HIDDEN_SIZE * HIDDEN_SIZE) * 2
    + (2 * HIDDEN_SIZE + _HALF) * 4
)


def _per_row_vmem_bytes(out_itemsize):
    return (
        2 * 4                              # t block, double-buffered
        + 2 * HIDDEN_SIZE * out_itemsize   # out block, double-buffered
        + _HALF * 4                        # args (f32)
        + FREQ_EMB_SIZE * 2                # cos/sin (or concat emb) bf16
        + 2 * HIDDEN_SIZE * 4              # h f32 + SiLU f32
        + HIDDEN_SIZE * 4                  # pre-cast f32 output
    )


# --------------------------------------------------------------------------- #
# Wrapper
# --------------------------------------------------------------------------- #
def timestep_embedder(t, w1, b1, w2, b2, *, out_dtype=jnp.bfloat16, block_rows=None):
    """t: (N,) timesteps. w1: (FREQ, HIDDEN), w2: (HIDDEN, HIDDEN) -- (in, out) layout.
    Returns (N, HIDDEN_SIZE) in `out_dtype` (bf16 by default for the production path)."""
    assert FREQ_EMB_SIZE % 2 == 0, "zero-pad branch dropped; freq size must be even"
    assert w1.shape == (FREQ_EMB_SIZE, HIDDEN_SIZE), "w1 must be (in, out) layout"
    assert w2.shape == (HIDDEN_SIZE, HIDDEN_SIZE), "w2 must be (in, out) layout"

    n = t.shape[0]
    gen = _tpu_generation()
    out_itemsize = jnp.dtype(out_dtype).itemsize

    # Generation-capped batch tile (per-step work must dwarf ~0.35us pipeline overhead).
    if block_rows is None:
        block_rows = {"v5": 2048, "v6": 8192, "v7": 4096}.get(gen, 4096)
    vmem_cap = (48 << 20) if gen == "v7" else (96 << 20)   # v7x: 64 MiB/TC physical

    # Keep tile's VMEM footprint comfortably under the cap.
    per_row = _per_row_vmem_bytes(out_itemsize)
    tn = block_rows
    while tn > 8 and _WEIGHT_VMEM_BYTES + per_row * tn > (vmem_cap * 3) // 4:
        tn //= 2

    # Sublane-aligned tile/padding (multiple of 8) even when n < block_rows.
    if n <= tn:
        tn = _round_up(max(n, 1), 8)
    else:
        tn = _round_up(tn, 8)
    n_pad = _round_up(n, tn)
    num_blocks = n_pad // tn

    vmem_needed = _WEIGHT_VMEM_BYTES + per_row * tn
    vmem_limit = min(vmem_cap, max(32 << 20, int(vmem_needed * 1.25) + (2 << 20)))

    # Compile-time frequency table (host numpy), fed as a tiny resident input.
    freqs = jnp.asarray(
        np.exp(-math.log(MAX_PERIOD) * np.arange(_HALF, dtype=np.float32) / _HALF)
    ).reshape(1, _HALF)

    t2d = t.astype(jnp.float32).reshape(n, 1)
    if n_pad != n:
        t2d = jnp.pad(t2d, ((0, n_pad - n), (0, 0)))

    w1_bf = w1.astype(jnp.bfloat16)
    w2_bf = w2.astype(jnp.bfloat16)
    b1_2d = b1.astype(jnp.float32).reshape(1, HIDDEN_SIZE)
    b2_2d = b2.astype(jnp.float32).reshape(1, HIDDEN_SIZE)

    # Weight/bias/freq specs: same block every grid step -> stay VMEM-resident.
    def resident(shape):
        return pl.BlockSpec(shape, lambda i, _s=shape: tuple(0 for _ in _s))

    cost = pl.CostEstimate(
        flops=2 * n_pad * (FREQ_EMB_SIZE * HIDDEN_SIZE + HIDDEN_SIZE * HIDDEN_SIZE),
        transcendentals=n_pad * (FREQ_EMB_SIZE + 2 * HIDDEN_SIZE),  # cos+sin+exp+rcp
        bytes_accessed=(w1_bf.size + w2_bf.size) * 2
        + (b1_2d.size + b2_2d.size + freqs.size) * 4
        + n_pad * 4
        + n_pad * HIDDEN_SIZE * out_itemsize,
    )

    merge_k1 = gen != "v5"   # v5e MXU is 128-deep: split-K already fills it

    out = pl.pallas_call(
        _make_kernel(merge_k1),
        out_shape=jax.ShapeDtypeStruct((n_pad, HIDDEN_SIZE), out_dtype),
        grid_spec=pltpu.PrefetchScalarGridSpec(
            num_scalar_prefetch=0,
            grid=(num_blocks,),
            in_specs=[
                pl.BlockSpec((tn, 1), lambda i: (i, 0)),            # t rows
                resident((1, _HALF)),                               # freqs
                resident((FREQ_EMB_SIZE, HIDDEN_SIZE)),             # w1 (bf16)
                resident((1, HIDDEN_SIZE)),                         # b1
                resident((HIDDEN_SIZE, HIDDEN_SIZE)),               # w2 (bf16)
                resident((1, HIDDEN_SIZE)),                         # b2
            ],
            out_specs=pl.BlockSpec((tn, HIDDEN_SIZE), lambda i: (i, 0)),
        ),
        compiler_params=pltpu.CompilerParams(
            dimension_semantics=("parallel",),
            vmem_limit_bytes=int(vmem_limit),
        ),
        cost_estimate=cost,
    )(t2d, freqs, w1_bf, b1_2d, w2_bf, b2_2d)

    return out[:n] if n_pad != n else out


# --------------------------------------------------------------------------- #
# References
# --------------------------------------------------------------------------- #
def reference_matched(t, w1, b1, w2, b2):
    """Mirrors the kernel math (bf16 matmul operands, f32 accumulate, exact sigmoid)."""
    freqs = jnp.exp(-math.log(MAX_PERIOD) * jnp.arange(_HALF, dtype=jnp.float32) / _HALF)
    args = t[:, None].astype(jnp.float32) * freqs[None]
    emb = jnp.concatenate([jnp.cos(args), jnp.sin(args)], axis=-1).astype(jnp.bfloat16)
    h = (jnp.dot(emb, w1.astype(jnp.bfloat16), preferred_element_type=jnp.float32)
         + b1.astype(jnp.float32))
    h = h * jax.nn.sigmoid(h)
    return (jnp.dot(h.astype(jnp.bfloat16), w2.astype(jnp.bfloat16),
                    preferred_element_type=jnp.float32)
            + b2.astype(jnp.float32))


def reference_f32(t, w1, b1, w2, b2):
    """Plain f32 PyTorch-equivalent reference."""
    freqs = jnp.exp(-math.log(MAX_PERIOD) * jnp.arange(_HALF, dtype=jnp.float32) / _HALF)
    args = t[:, None].astype(jnp.float32) * freqs[None]
    emb = jnp.concatenate([jnp.cos(args), jnp.sin(args)], axis=-1)
    h = emb @ w1 + b1
    h = h * jax.nn.sigmoid(h)
    return h @ w2 + b2


# --------------------------------------------------------------------------- #
# Test
# --------------------------------------------------------------------------- #
if __name__ == "__main__":
    key = jax.random.PRNGKey(0)
    k_t, k_w1, k_b1, k_w2, k_b2 = jax.random.split(key, 5)

    N = 8
    t = jax.random.uniform(k_t, (N,), jnp.float32, minval=0.0, maxval=1000.0)
    w1 = jax.random.normal(k_w1, (FREQ_EMB_SIZE, HIDDEN_SIZE), jnp.float32) * 0.02
    b1 = jax.random.normal(k_b1, (HIDDEN_SIZE,), jnp.float32) * 0.02
    w2 = jax.random.normal(k_w2, (HIDDEN_SIZE, HIDDEN_SIZE), jnp.float32) * 0.02
    b2 = jax.random.normal(k_b2, (HIDDEN_SIZE,), jnp.float32) * 0.02

    # Numerics path: f32 output.
    out_f32 = jax.block_until_ready(
        timestep_embedder(t, w1, b1, w2, b2, out_dtype=jnp.float32))
    ref_m = reference_matched(t, w1, b1, w2, b2)
    ref_f = reference_f32(t, w1, b1, w2, b2)

    assert out_f32.shape == (N, HIDDEN_SIZE)
    assert jnp.allclose(out_f32, ref_m, atol=5e-3, rtol=5e-3), \
        "mismatch vs bf16-matched reference"
    assert jnp.allclose(out_f32, ref_f, atol=3e-2, rtol=3e-2), \
        "mismatch vs f32 reference"

    # Production path: bf16 output, batch not a multiple of 8 (exercises padding).
    out_bf16 = jax.block_until_ready(timestep_embedder(t[:5], w1, b1, w2, b2))
    assert out_bf16.shape == (5, HIDDEN_SIZE) and out_bf16.dtype == jnp.bfloat16
    assert jnp.allclose(out_bf16.astype(jnp.float32), ref_f[:5], atol=5e-2, rtol=5e-2), \
        "mismatch vs f32 reference (bf16 output path)"

    print("KERNEL_OK")
</pallas_src>

<mosaic_0001>
module attributes {stable_mosaic.version = 11 : i64} {
  func.func @kernel(%arg0: i32, %arg1: memref<8x1xf32, #tpu.memory_space<vmem>>, %arg2: memref<1x128xf32, #tpu.memory_space<vmem>>, %arg3: memref<256x128xbf16, #tpu.memory_space<vmem>>, %arg4: memref<1x128xf32, #tpu.memory_space<vmem>>, %arg5: memref<128x128xbf16, #tpu.memory_space<vmem>>, %arg6: memref<1x128xf32, #tpu.memory_space<vmem>>, %arg7: memref<8x128xf32, #tpu.memory_space<vmem>>) attributes {dimension_semantics = [#tpu.dimension_semantics<parallel>], iteration_bounds = array<i64: 1>, scalar_prefetch = 0 : i64, scratch_operands = 0 : i64, tpu.core_type = #tpu.core_type<tc>, window_params = [{transform_indices = @transform_0, window_bounds = array<i64: 8, 1>}, {pipeline_mode = #tpu.pipeline_mode<synchronous>, transform_indices = @transform_1, window_bounds = array<i64: 1, 128>}, {pipeline_mode = #tpu.pipeline_mode<synchronous>, transform_indices = @transform_2, window_bounds = array<i64: 256, 128>}, {pipeline_mode = #tpu.pipeline_mode<synchronous>, transform_indices = @transform_3, window_bounds = array<i64: 1, 128>}, {pipeline_mode = #tpu.pipeline_mode<synchronous>, transform_indices = @transform_4, window_bounds = array<i64: 128, 128>}, {pipeline_mode = #tpu.pipeline_mode<synchronous>, transform_indices = @transform_5, window_bounds = array<i64: 1, 128>}, {transform_indices = @transform_6, window_bounds = array<i64: 8, 128>}]} {
    %c0 = arith.constant 0 : index
    %c0_0 = arith.constant 0 : index
    %0 = vector.load %arg1[%c0, %c0_0] : memref<8x1xf32, #tpu.memory_space<vmem>>, vector<8x1xf32>
    %c0_1 = arith.constant 0 : index
    %c0_2 = arith.constant 0 : index
    %1 = vector.load %arg2[%c0_1, %c0_2] : memref<1x128xf32, #tpu.memory_space<vmem>>, vector<1x128xf32>
    %2 = vector.broadcast %0 : vector<8x1xf32> to vector<8x128xf32>
    %3 = vector.broadcast %1 : vector<1x128xf32> to vector<8x128xf32>
    %4 = arith.mulf %2, %3 : vector<8x128xf32>
    %5 = math.cos %4 : vector<8x128xf32>
    %6 = arith.truncf %5 : vector<8x128xf32> to vector<8x128xbf16>
    %7 = math.sin %4 : vector<8x128xf32>
    %8 = arith.truncf %7 : vector<8x128xf32> to vector<8x128xbf16>
    %9 = tpu.concatenate %6, %8 in 1 : vector<8x128xbf16>, vector<8x128xbf16> -> vector<8x256xbf16>
    %c0_3 = arith.constant 0 : index
    %c0_4 = arith.constant 0 : index
    %10 = vector.load %arg3[%c0_3, %c0_4] : memref<256x128xbf16, #tpu.memory_space<vmem>>, vector<256x128xbf16>
    %cst = arith.constant dense<0.000000e+00> : vector<8x128xf32>
    %11 = tpu.matmul %9, %10, %cst {dimension_numbers = #tpu.dot_dimension_numbers<[1], [0], [0], [1], [0, 0, 1, 1], [], []>} : vector<8x256xbf16>, vector<256x128xbf16>, vector<8x128xf32> -> vector<8x128xf32>
    %c0_5 = arith.constant 0 : index
    %c0_6 = arith.constant 0 : index
    %12 = vector.load %arg4[%c0_5, %c0_6] : memref<1x128xf32, #tpu.memory_space<vmem>>, vector<1x128xf32>
    %13 = vector.broadcast %12 : vector<1x128xf32> to vector<8x128xf32>
    %14 = arith.addf %11, %13 : vector<8x128xf32>
    %cst_7 = arith.constant 0.000000e+00 : f32
    %15 = vector.broadcast %cst_7 : f32 to vector<8x128xf32>
    %16 = arith.subf %15, %14 : vector<8x128xf32>
    %17 = math.exp %16 : vector<8x128xf32>
    %cst_8 = arith.constant 1.000000e+00 : f32
    %18 = vector.broadcast %cst_8 : f32 to vector<8x128xf32>
    %19 = arith.addf %18, %17 : vector<8x128xf32>
    %20 = tpu.reciprocal %19 {approx = true} : vector<8x128xf32> -> vector<8x128xf32>
    %21 = arith.mulf %14, %20 : vector<8x128xf32>
    %22 = arith.truncf %21 : vector<8x128xf32> to vector<8x128xbf16>
    %c0_9 = arith.constant 0 : index
    %c0_10 = arith.constant 0 : index
    %23 = vector.load %arg5[%c0_9, %c0_10] : memref<128x128xbf16, #tpu.memory_space<vmem>>, vector<128x128xbf16>
    %cst_11 = arith.constant dense<0.000000e+00> : vector<8x128xf32>
    %24 = tpu.matmul %22, %23, %cst_11 {dimension_numbers = #tpu.dot_dimension_numbers<[1], [0], [0], [1], [0, 0, 1, 1], [], []>} : vector<8x128xbf16>, vector<128x128xbf16>, vector<8x128xf32> -> vector<8x128xf32>
    %c0_12 = arith.constant 0 : index
    %c0_13 = arith.constant 0 : index
    %25 = vector.load %arg6[%c0_12, %c0_13] : memref<1x128xf32, #tpu.memory_space<vmem>>, vector<1x128xf32>
    %26 = vector.broadcast %25 : vector<1x128xf32> to vector<8x128xf32>
    %27 = arith.addf %24, %26 : vector<8x128xf32>
    %c0_14 = arith.constant 0 : index
    %c0_15 = arith.constant 0 : index
    %28 = vector.load %arg7[%c0_14, %c0_15] : memref<8x128xf32, #tpu.memory_space<vmem>>, vector<8x128xf32>
    tpu.vector_store %arg7[%c0_14, %c0_15], %27 {strides = array<i32>} : memref<8x128xf32, #tpu.memory_space<vmem>>, vector<8x128xf32>,
    return
  }
  func.func @transform_0(%arg0: i32) -> (i32, i32) {
    %c0_i32 = arith.constant 0 : i32
    %c0_i32_0 = arith.constant 0 : i32
    return %arg0, %c0_i32 : i32, i32
  }
  func.func @transform_1(%arg0: i32) -> (i32, i32) {
    %c0_i32 = arith.constant 0 : i32
    %c0_i32_0 = arith.constant 0 : i32
    %c0_i32_1 = arith.constant 0 : i32
    return %c0_i32, %c0_i32_0 : i32, i32
  }
  func.func @transform_2(%arg0: i32) -> (i32, i32) {
    %c0_i32 = arith.constant 0 : i32
    %c0_i32_0 = arith.constant 0 : i32
    %c0_i32_1 = arith.constant 0 : i32
    return %c0_i32, %c0_i32_0 : i32, i32
  }
  func.func @transform_3(%arg0: i32) -> (i32, i32) {
    %c0_i32 = arith.constant 0 : i32
    %c0_i32_0 = arith.constant 0 : i32
    %c0_i32_1 = arith.constant 0 : i32
    return %c0_i32, %c0_i32_0 : i32, i32
  }
  func.func @transform_4(%arg0: i32) -> (i32, i32) {
    %c0_i32 = arith.constant 0 : i32
    %c0_i32_0 = arith.constant 0 : i32
    %c0_i32_1 = arith.constant 0 : i32
    return %c0_i32, %c0_i32_0 : i32, i32
  }
  func.func @transform_5(%arg0: i32) -> (i32, i32) {
    %c0_i32 = arith.constant 0 : i32
    %c0_i32_0 = arith.constant 0 : i32
    %c0_i32_1 = arith.constant 0 : i32
    return %c0_i32, %c0_i32_0 : i32, i32
  }
  func.func @transform_6(%arg0: i32) -> (i32, i32) {
    %c0_i32 = arith.constant 0 : i32
    %c0_i32_0 = arith.constant 0 : i32
    return %arg0, %c0_i32 : i32, i32
  }
}

</mosaic_0001>

<llo_original>
// kernel: tpu_custom_call.1
$region0: #{tpu_custom_call.1}
  #allocation0 [shape = 'u32[]', space=smem, size = 0x4, offset = 0x4, fixed_abs, tag = 'smem constant byte address 0x4 - core index']
  #allocation1 [shape = 'u32[144,128]{1,0:T(1,128)}', space=vmem, size = 0x12000, scoped, tag = 'internal scratch']
  %s0 = inlined_call_operand.vmem [shape: f32[8,1], index: 0, kind: input, shape index: {}]
  %s1 = inlined_call_operand.vmem [shape: f32[1,128], index: 1, kind: input, shape index: {}]
  %s2 = inlined_call_operand.hbm [shape: bf16[256,128], index: 2, kind: input, shape index: {}]
  %s3 = inlined_call_operand.vmem [shape: f32[1,128], index: 3, kind: input, shape index: {}]
  %s4 = inlined_call_operand.hbm [shape: bf16[128,128], index: 4, kind: input, shape index: {}]
  %s5 = inlined_call_operand.vmem [shape: f32[1,128], index: 5, kind: input, shape index: {}]
  %s6 = inlined_call_operand.hbm [shape: f32[8,128], index: 6, kind: output, shape index: {}]
  %s7 = sld [smem:[#allocation0]]
  $region42: #{tpu_custom_call.1} parent=0
    _
  %s9 = ssub.s32 1, %s7
  %s10 = scalar_select 0, %s9, %s7
  $region1: #{tpu_custom_call.1} parent=0
    #allocation2 [shape = 'u8[65536]{0}', space=vmem, size = 0x10000, scoped, tag = 'input window, operand 2, single buffered']
    #allocation3 [shape = 's32[1]{0}', space=sflag, size = 0x4, scoped, tag = 'scoped memory for tpu_custom_call.1']
    #allocation4 [shape = 's32[1]{0}', space=sflag, size = 0x4, scoped, tag = 'scoped memory for tpu_custom_call.1']
    #allocation5 [shape = 'u8[32768]{0}', space=vmem, size = 0x8000, scoped, tag = 'input window, operand 4, single buffered']
    #allocation6 [shape = 's32[1]{0}', space=sflag, size = 0x4, scoped, tag = 'scoped memory for tpu_custom_call.1']
    #allocation7 [shape = 'u8[4096]{0}', space=vmem, size = 0x1000, scoped, tag = 'output window, operand 0, single buffered']
    %11 = vsyncpa [#allocation3], 0
    %12 = vsyncpa [#allocation6], 0
    %13 = vsyncpa [#allocation4], 0
    // Predicated region
    $region2: #{tpu_custom_call.1} parent=1 // pred_check
      _
    $region3: #{tpu_custom_call.1} parent=1 // pred_check_branch
      %15 = sbr.rel (0) target = $region5
    $region4: #{tpu_custom_call.1} parent=1 // pred_region
      _
    $region5: #{tpu_custom_call.1} parent=1 // pred_fallthru
      _
    // Predicated region
    $region6: #{tpu_custom_call.1} parent=1 // pred_check
      _
    $region7: #{tpu_custom_call.1} parent=1 // pred_check_branch
      %17 = sbr.rel (0) target = $region9
    $region8: #{tpu_custom_call.1} parent=1 // pred_region
      _
    $region9: #{tpu_custom_call.1} parent=1 // pred_fallthru
      _
    // Predicated region
    $region10: #{tpu_custom_call.1} parent=1 // pred_check
      _
    $region11: #{tpu_custom_call.1} parent=1 // pred_check_branch
      %19 = sbr.rel (0) target = $region13
    $region12: #{tpu_custom_call.1} parent=1 // pred_region
      %s21 = ssub.s32 2048, 2048
      %22 = vsyncadd [#allocation3], %s21
      %s23 = sshll.u32 [#allocation2], 4
      %s24 = int_to_ptr.vmem [resolvable:$true] %s23
      %29 = dma.hbm_to_vmem [thread:$0]  %s2, 2048, %s24, [#allocation3], 64, 64, 4
    $region13: #{tpu_custom_call.1} parent=1 // pred_fallthru
      _
    // Predicated region
    $region14: #{tpu_custom_call.1} parent=1 // pred_check
      _
    $region15: #{tpu_custom_call.1} parent=1 // pred_check_branch
      %31 = sbr.rel (0) target = $region17
    $region16: #{tpu_custom_call.1} parent=1 // pred_region
      _
    $region17: #{tpu_custom_call.1} parent=1 // pred_fallthru
      _
    // Predicated region
    $region18: #{tpu_custom_call.1} parent=1 // pred_check
      _
    $region19: #{tpu_custom_call.1} parent=1 // pred_check_branch
      %33 = sbr.rel (0) target = $region21
    $region20: #{tpu_custom_call.1} parent=1 // pred_region
      %s35 = ssub.s32 1024, 1024
      %36 = vsyncadd [#allocation6], %s35
      %s37 = sshll.u32 [#allocation5], 4
      %s38 = int_to_ptr.vmem [resolvable:$true] %s37
      %43 = dma.hbm_to_vmem [thread:$0]  %s4, 1024, %s38, [#allocation6], 64, 64, 4
    $region21: #{tpu_custom_call.1} parent=1 // pred_fallthru
      _
    // Predicated region
    $region22: #{tpu_custom_call.1} parent=1 // pred_check
      _
    $region23: #{tpu_custom_call.1} parent=1 // pred_check_branch
      %45 = sbr.rel (0) target = $region25
    $region24: #{tpu_custom_call.1} parent=1 // pred_region
      _
    $region25: #{tpu_custom_call.1} parent=1 // pred_fallthru
      _
    // Predicated region
    $region26: #{tpu_custom_call.1} parent=1 // pred_check
      _
    $region27: #{tpu_custom_call.1} parent=1 // pred_check_branch
      %47 = sbr.rel (0) target = $region29
    $region28: #{tpu_custom_call.1} parent=1 // pred_region
      %48 = dma.done [#allocation3], 2048
    $region29: #{tpu_custom_call.1} parent=1 // pred_fallthru
      _
    // Predicated region
    $region30: #{tpu_custom_call.1} parent=1 // pred_check
      _
    $region31: #{tpu_custom_call.1} parent=1 // pred_check_branch
      %50 = sbr.rel (0) target = $region33
    $region32: #{tpu_custom_call.1} parent=1 // pred_region
      %51 = dma.done [#allocation6], 1024
    $region33: #{tpu_custom_call.1} parent=1 // pred_fallthru
      _
    %v53 = vld [vmem:[%s0] sm:$0xff]
    %v54 = vld [vmem:[%s1] sm:$0x1]
    %56 = vset.pattern.permute.xlu0 0
    %57 = vperm.xlu0 %56, %v53
    %v58 = vpop.permute.xlu0 %57
    %v61 = vlaneseq
    %v62 = vshrl.u32 %v61, 7
    %v63 = vsub.s32 0, %v62
    %v64 = vrot.slane %v54, %v63
    %v66 = vmul.f32 %v58, %v64
    %v67 = vand.u32 2147483647, %v66
    %vm68 = vcmp.le.f32.partialorder %v67, 0.7853982
    %vm69 = vcmp.lt.s32.totalorder %v66, 0
    %v70 = vand.u32 %v66, 2139095040
    %v71 = vshrl.u32 %v70, 23
    %v72 = vsub.s32 %v71, 127
    %v73 = vand.u32 2147483647, %v66
    %v74 = vand.u32 %v73, 8388607
    %v75 = vor.u32 %v74, 8388608
    %v76 = vsub.s32 0, %v75
    %v77 = vadd.s32 %v72, 1
    %vm78 = vcmp.gt.s32.totalorder %v77, 0
    %v79 = vsel %vm78, %v77, 0
    %v80 = vshrl.u32 %v79, 5
    %v81 = vand.u32 %v79, 31
    %v82 = vsub.s32 32, %v81
    %v83 = vshrl.u32 683565275, %v82
    %v84 = vshll.u32 683565275, %v81
    %v85 = vshrl.u32 2475754826, %v82
    %v86 = vor.u32 %v84, %v85
    %v87 = vshll.u32 2475754826, %v81
    %v88 = vshrl.u32 2131351028, %v82
    %v89 = vor.u32 %v87, %v88
    %v90 = vshll.u32 2131351028, %v81
    %v91 = vshrl.u32 2102212464, %v82
    %v92 = vor.u32 %v90, %v91
    %v93 = vshll.u32 2102212464, %v81
    %v94 = vshrl.u32 920167782, %v82
    %v95 = vor.u32 %v93, %v94
    %v96 = vshll.u32 920167782, %v81
    %v97 = vshrl.u32 1326507024, %v82
    %v98 = vor.u32 %v96, %v97
    %vm99 = vcmp.lt.s32.totalorder %v80, 1
    %vm100 = vcmp.lt.s32.totalorder %v80, 2
    %vm101 = vcmp.lt.s32.totalorder %v80, 3
    %vm102 = vcmp.lt.s32.totalorder %v80, 4
    %v103 = vsel %vm99, %v83, %v86
    %v104 = vsel %vm102, %v92, 2102212464
    %v105 = vsel %vm101, %v89, %v104
    %v106 = vsel %vm100, %v103, %v105
    %v107 = vsel %vm99, %v86, %v89
    %v108 = vsel %vm102, %v95, 920167782
    %v109 = vsel %vm101, %v92, %v108
    %v110 = vsel %vm100, %v107, %v109
    %v111 = vsel %vm99, %v89, %v92
    %v112 = vsel %vm102, %v98, 1326507024
    %v113 = vsel %vm101, %v95, %v112
    %v114 = vsel %vm100, %v111, %v113
    %v115 = vshll.u32 %v75, 8
    %v116 = vmul.u32.u64.compose %v115, %v114
    %v117 = vextract.low.u32 %v116
    %v118 = vextract.high.u32 %v116
    %v119 = vmul.u32.u64.compose %v115, %v110
    %v120 = vextract.low.u32 %v119
    %v121 = vextract.high.u32 %v119
    %v122 = vmul.u32 %v115, %v106
    %v123 = vadd.s32 %v118, %v120
    %vm124 = vc.u32 %v118, %v120
    %v125 = vadd.s32 %v121, 1
    %v126 = vsel %vm124, %v125, %v121
    %v127 = vadd.s32 %v122, %v126
    %v128 = vadd.s32 %v127, 536870912
    %v129 = vshrl.u32 %v128, 30
    %v130 = vshll.u32 %v129, 30
    %v131 = vsub.s32 %v127, %v130
    %vm132 = vcmp.lt.s32.totalorder %v131, 0
    %v133 = vsub.s32 0, %v131
    %v134 = vsel %vm132, %v133, %v131
    %v135 = vclz %v134
    %v136 = vsub.s32 %v135, 2
    %vm137 = vcmp.gt.s32.totalorder 0, %v136
    %v138 = vsel %vm137, 0, %v136
    %v139 = vsub.s32 32, %v138
    %v140 = vshll.u32 %v131, %v138
    %v141 = vshrl.u32 %v123, %v139
    %v142 = vor.u32 %v140, %v141
    %v143 = vsub.s32 4294967266, %v138
    %v144 = vadd.s32 %v143, 127
    %v145 = vshll.u32 %v144, 23
    %v146 = vor.u32 4788187, %v145
    %v147 = vand.u32 2147483647, %v146
    %v149 = vcvt.s32.f32 %v142
    %v150 = vmul.f32 %v149, %v147
    %v151 = vxor.u32 %v150, 2147483648
    %v152 = vsel %vm69, %v151, %v150
    %v153 = vsub.s32 4, %v129
    %v154 = vsel %vm69, %v153, %v129
    %v155 = vsel %vm68, %v66, %v152
    %v156 = vsel %vm68, 0, %v154
    %v157 = vcosq.f32.pop %v155
    %v158 = vsinq.f32.pop %v155
    %vm159 = vweird.f32 %v66
    %v160 = vand.u32 %v156, 3
    %vm161 = vcmp.lt.s32.totalorder %v160, 2
    %vm162 = vcmp.eq.s32.totalorder %v160, 0
    %v163 = vxor.u32 %v158, 2147483648
    %v164 = vsel %vm162, %v157, %v163
    %vm165 = vcmp.eq.s32.totalorder %v160, 2
    %v166 = vxor.u32 %v157, 2147483648
    %v167 = vsel %vm165, %v166, %v158
    %v168 = vsel %vm161, %v164, %v167
    %v169 = vsel %vm159, nan, %v168
    %v170 = vpack.c.bf16 %v169, %v169
    %v171 = vand.u32 2147483647, %v66
    %vm172 = vcmp.le.f32.partialorder %v171, 0.7853982
    %vm173 = vcmp.lt.s32.totalorder %v66, 0
    %v174 = vand.u32 %v66, 2139095040
    %v175 = vshrl.u32 %v174, 23
    %v176 = vsub.s32 %v175, 127
    %v177 = vand.u32 2147483647, %v66
    %v178 = vand.u32 %v177, 8388607
    %v179 = vor.u32 %v178, 8388608
    %v180 = vsub.s32 0, %v179
    %v181 = vadd.s32 %v176, 1
    %vm182 = vcmp.gt.s32.totalorder %v181, 0
    %v183 = vsel %vm182, %v181, 0
    %v184 = vshrl.u32 %v183, 5
    %v185 = vand.u32 %v183, 31
    %v186 = vsub.s32 32, %v185
    %v187 = vshrl.u32 683565275, %v186
    %v188 = vshll.u32 683565275, %v185
    %v189 = vshrl.u32 2475754826, %v186
    %v190 = vor.u32 %v188, %v189
    %v191 = vshll.u32 2475754826, %v185
    %v192 = vshrl.u32 2131351028, %v186
    %v193 = vor.u32 %v191, %v192
    %v194 = vshll.u32 2131351028, %v185
    %v195 = vshrl.u32 2102212464, %v186
    %v196 = vor.u32 %v194, %v195
    %v197 = vshll.u32 2102212464, %v185
    %v198 = vshrl.u32 920167782, %v186
    %v199 = vor.u32 %v197, %v198
    %v200 = vshll.u32 920167782, %v185
    %v201 = vshrl.u32 1326507024, %v186
    %v202 = vor.u32 %v200, %v201
    %vm203 = vcmp.lt.s32.totalorder %v184, 1
    %vm204 = vcmp.lt.s32.totalorder %v184, 2
    %vm205 = vcmp.lt.s32.totalorder %v184, 3
    %vm206 = vcmp.lt.s32.totalorder %v184, 4
    %v207 = vsel %vm203, %v187, %v190
    %v208 = vsel %vm206, %v196, 2102212464
    %v209 = vsel %vm205, %v193, %v208
    %v210 = vsel %vm204, %v207, %v209
    %v211 = vsel %vm203, %v190, %v193
    %v212 = vsel %vm206, %v199, 920167782
    %v213 = vsel %vm205, %v196, %v212
    %v214 = vsel %vm204, %v211, %v213
    %v215 = vsel %vm203, %v193, %v196
    %v216 = vsel %vm206, %v202, 1326507024
    %v217 = vsel %vm205, %v199, %v216
    %v218 = vsel %vm204, %v215, %v217
    %v219 = vshll.u32 %v179, 8
    %v220 = vmul.u32.u64.compose %v219, %v218
    %v221 = vextract.low.u32 %v220
    %v222 = vextract.high.u32 %v220
    %v223 = vmul.u32.u64.compose %v219, %v214
    %v224 = vextract.low.u32 %v223
    %v225 = vextract.high.u32 %v223
    %v226 = vmul.u32 %v219, %v210
    %v227 = vadd.s32 %v222, %v224
    %vm228 = vc.u32 %v222, %v224
    %v229 = vadd.s32 %v225, 1
    %v230 = vsel %vm228, %v229, %v225
    %v231 = vadd.s32 %v226, %v230
    %v232 = vadd.s32 %v231, 536870912
    %v233 = vshrl.u32 %v232, 30
    %v234 = vshll.u32 %v233, 30
    %v235 = vsub.s32 %v231, %v234
    %vm236 = vcmp.lt.s32.totalorder %v235, 0
    %v237 = vsub.s32 0, %v235
    %v238 = vsel %vm236, %v237, %v235
    %v239 = vclz %v238
    %v240 = vsub.s32 %v239, 2
    %vm241 = vcmp.gt.s32.totalorder 0, %v240
    %v242 = vsel %vm241, 0, %v240
    %v243 = vsub.s32 32, %v242
    %v244 = vshll.u32 %v235, %v242
    %v245 = vshrl.u32 %v227, %v243
    %v246 = vor.u32 %v244, %v245
    %v247 = vsub.s32 4294967266, %v242
    %v248 = vadd.s32 %v247, 127
    %v249 = vshll.u32 %v248, 23
    %v250 = vor.u32 4788187, %v249
    %v251 = vand.u32 2147483647, %v250
    %v253 = vcvt.s32.f32 %v246
    %v254 = vmul.f32 %v253, %v251
    %v255 = vxor.u32 %v254, 2147483648
    %v256 = vsel %vm173, %v255, %v254
    %v257 = vsub.s32 4, %v233
    %v258 = vsel %vm173, %v257, %v233
    %v259 = vsel %vm172, %v66, %v256
    %v260 = vsel %vm172, 0, %v258
    %v261 = vcosq.f32.pop %v259
    %v262 = vsinq.f32.pop %v259
    %vm263 = vweird.f32 %v66
    %v264 = vadd.s32 %v260, 3
    %v265 = vand.u32 %v264, 3
    %vm266 = vcmp.lt.s32.totalorder %v265, 2
    %vm267 = vcmp.eq.s32.totalorder %v265, 0
    %v268 = vxor.u32 %v262, 2147483648
    %v269 = vsel %vm267, %v261, %v268
    %vm270 = vcmp.eq.s32.totalorder %v265, 2
    %v271 = vxor.u32 %v261, 2147483648
    %v272 = vsel %vm270, %v271, %v262
    %v273 = vsel %vm266, %v269, %v272
    %v274 = vsel %vm263, nan, %v273
    %v275 = vpack.c.bf16 %v274, %v274
    %v276 = vld [vmem:[#allocation2] sm:$0xf]
    %v277 = vld [vmem:[#allocation2 + $0x4] sm:$0xf]
    %v278 = vld [vmem:[#allocation2 + $0x8] sm:$0xf]
    %v279 = vld [vmem:[#allocation2 + $0xc] sm:$0xf]
    %v280 = vld [vmem:[#allocation2 + $0x10] sm:$0xf]
    %v281 = vld [vmem:[#allocation2 + $0x14] sm:$0xf]
    %v282 = vld [vmem:[#allocation2 + $0x18] sm:$0xf]
    %v283 = vld [vmem:[#allocation2 + $0x1c] sm:$0xf]
    %v284 = vld [vmem:[#allocation2 + $0x20] sm:$0xf]
    %v285 = vld [vmem:[#allocation2 + $0x24] sm:$0xf]
    %v286 = vld [vmem:[#allocation2 + $0x28] sm:$0xf]
    %v287 = vld [vmem:[#allocation2 + $0x2c] sm:$0xf]
    %v288 = vld [vmem:[#allocation2 + $0x30] sm:$0xf]
    %v289 = vld [vmem:[#allocation2 + $0x34] sm:$0xf]
    %v290 = vld [vmem:[#allocation2 + $0x38] sm:$0xf]
    %v291 = vld [vmem:[#allocation2 + $0x3c] sm:$0xf]
    %v292 = vld [vmem:[#allocation2 + $0x40] sm:$0xf]
    %v293 = vld [vmem:[#allocation2 + $0x44] sm:$0xf]
    %v294 = vld [vmem:[#allocation2 + $0x48] sm:$0xf]
    %v295 = vld [vmem:[#allocation2 + $0x4c] sm:$0xf]
    %v296 = vld [vmem:[#allocation2 + $0x50] sm:$0xf]
    %v297 = vld [vmem:[#allocation2 + $0x54] sm:$0xf]
    %v298 = vld [vmem:[#allocation2 + $0x58] sm:$0xf]
    %v299 = vld [vmem:[#allocation2 + $0x5c] sm:$0xf]
    %v300 = vld [vmem:[#allocation2 + $0x60] sm:$0xf]
    %v301 = vld [vmem:[#allocation2 + $0x64] sm:$0xf]
    %v302 = vld [vmem:[#allocation2 + $0x68] sm:$0xf]
    %v303 = vld [vmem:[#allocation2 + $0x6c] sm:$0xf]
    %v304 = vld [vmem:[#allocation2 + $0x70] sm:$0xf]
    %v305 = vld [vmem:[#allocation2 + $0x74] sm:$0xf]
    %v306 = vld [vmem:[#allocation2 + $0x78] sm:$0xf]
    %v307 = vld [vmem:[#allocation2 + $0x7c] sm:$0xf]
    %v308 = vld [vmem:[%s3] sm:$0x1]
    %v310 = vlaneseq
    %v311 = vshrl.u32 %v310, 7
    %v312 = vsub.s32 0, %v311
    %v313 = vrot.slane %v308, %v312
    %v347 = vunpack.c.l.b16 %v276
    %v348 = vunpack.c.l.b16 %v277
    %v349 = vunpack.c.l.b16 %v278
    %v350 = vunpack.c.l.b16 %v279
    %v351 = vunpack.c.l.b16 %v280
    %v352 = vunpack.c.l.b16 %v281
    %v353 = vunpack.c.l.b16 %v282
    %v354 = vunpack.c.l.b16 %v283
    %v355 = vunpack.c.l.b16 %v284
    %v356 = vunpack.c.l.b16 %v285
    %v357 = vunpack.c.l.b16 %v286
    %v358 = vunpack.c.l.b16 %v287
    %v359 = vunpack.c.l.b16 %v288
    %v360 = vunpack.c.l.b16 %v289
    %v361 = vunpack.c.l.b16 %v290
    %v362 = vunpack.c.l.b16 %v291
    %v363 = vunpack.c.l.b16 %v292
    %v364 = vunpack.c.l.b16 %v293
    %v365 = vunpack.c.l.b16 %v294
    %v366 = vunpack.c.l.b16 %v295
    %v367 = vunpack.c.l.b16 %v296
    %v368 = vunpack.c.l.b16 %v297
    %v369 = vunpack.c.l.b16 %v298
    %v370 = vunpack.c.l.b16 %v299
    %v371 = vunpack.c.l.b16 %v300
    %v372 = vunpack.c.l.b16 %v301
    %v373 = vunpack.c.l.b16 %v302
    %v374 = vunpack.c.l.b16 %v303
    %v375 = vunpack.c.l.b16 %v304
    %v376 = vunpack.c.l.b16 %v305
    %v377 = vunpack.c.l.b16 %v306
    %v378 = vunpack.c.l.b16 %v307
    %v379 = vpack.c.b16 %v348, %v347
    %v380 = vpack.c.b16 %v350, %v349
    %v381 = vpack.c.b16 %v352, %v351
    %v382 = vpack.c.b16 %v354, %v353
    %v383 = vpack.c.b16 %v356, %v355
    %v384 = vpack.c.b16 %v358, %v357
    %v385 = vpack.c.b16 %v360, %v359
    %v386 = vpack.c.b16 %v362, %v361
    %v387 = vpack.c.b16 %v364, %v363
    %v388 = vpack.c.b16 %v366, %v365
    %v389 = vpack.c.b16 %v368, %v367
    %v390 = vpack.c.b16 %v370, %v369
    %v391 = vpack.c.b16 %v372, %v371
    %v392 = vpack.c.b16 %v374, %v373
    %v393 = vpack.c.b16 %v376, %v375
    %v394 = vpack.c.b16 %v378, %v377
    %411 = vmatprep.subr.bf16.mxu0 0
    %412 = vmatpush1.bf16.msra.mxu0 %v379
    %413 = vmatprep.subr.bf16.mxu0 0
    %414 = vmatpush1.bf16.msra.mxu0 %v380
    %415 = vmatprep.subr.bf16.mxu0 0
    %416 = vmatpush1.bf16.msra.mxu0 %v381
    %417 = vmatprep.subr.bf16.mxu0 0
    %418 = vmatpush1.bf16.msra.mxu0 %v382
    %419 = vmatprep.subr.bf16.mxu0 0
    %420 = vmatpush1.bf16.msra.mxu0 %v383
    %421 = vmatprep.subr.bf16.mxu0 0
    %422 = vmatpush1.bf16.msra.mxu0 %v384
    %423 = vmatprep.subr.bf16.mxu0 0
    %424 = vmatpush1.bf16.msra.mxu0 %v385
    %425 = vmatprep.subr.bf16.mxu0 0
    %426 = vmatpush1.bf16.msra.mxu0 %v386
    %427 = vmatprep.subr.bf16.mxu0 0
    %428 = vmatpush1.bf16.msra.mxu0 %v387
    %429 = vmatprep.subr.bf16.mxu0 0
    %430 = vmatpush1.bf16.msra.mxu0 %v388
    %431 = vmatprep.subr.bf16.mxu0 0
    %432 = vmatpush1.bf16.msra.mxu0 %v389
    %433 = vmatprep.subr.bf16.mxu0 0
    %434 = vmatpush1.bf16.msra.mxu0 %v390
    %435 = vmatprep.subr.bf16.mxu0 0
    %436 = vmatpush1.bf16.msra.mxu0 %v391
    %437 = vmatprep.subr.bf16.mxu0 0
    %438 = vmatpush1.bf16.msra.mxu0 %v392
    %439 = vmatprep.subr.bf16.mxu0 0
    %440 = vmatpush1.bf16.msra.mxu0 %v393
    %441 = vmatprep.subr.bf16.mxu0 0
    %442 = vmatpush1.bf16.msra.mxu0 %v394
    %443 = vmatprep.mubr.bf16.mxu0 %v275
    %444 = vmatmul.mubr.bf16.gmra.mrb[0].mxu0 %v170
    %v445 = vpop.f32.mrb[0].mxu0
    %v446 = vadd.f32 %v313, %v445
    %v447 = vpop.f32.mrb[0].mxu0
    %v448 = vpop.f32.mrb[0].mxu0
    %v449 = vpop.f32.mrb[0].mxu0
    %450 = vdwg.mxu0
    %v451 = vsub.f32 0.0, %v446
    %v452 = vmul.f32 %v451, 1.442695
    %v453 = vpow.pop %v452
    %v454 = vadd.f32 %v453, 1.0
    %v455 = vrcp.pop %v454
    %v456 = vmul.f32 %v446, %v455
    %v457 = vpack.c.bf16 %v456, %v456
    %v458 = vld [vmem:[#allocation5] sm:$0xf]
    %v459 = vld [vmem:[#allocation5 + $0x4] sm:$0xf]
    %v460 = vld [vmem:[#allocation5 + $0x8] sm:$0xf]
    %v461 = vld [vmem:[#allocation5 + $0xc] sm:$0xf]
    %v462 = vld [vmem:[#allocation5 + $0x10] sm:$0xf]
    %v463 = vld [vmem:[#allocation5 + $0x14] sm:$0xf]
    %v464 = vld [vmem:[#allocation5 + $0x18] sm:$0xf]
    %v465 = vld [vmem:[#allocation5 + $0x1c] sm:$0xf]
    %v466 = vld [vmem:[#allocation5 + $0x20] sm:$0xf]
    %v467 = vld [vmem:[#allocation5 + $0x24] sm:$0xf]
    %v468 = vld [vmem:[#allocation5 + $0x28] sm:$0xf]
    %v469 = vld [vmem:[#allocation5 + $0x2c] sm:$0xf]
    %v470 = vld [vmem:[#allocation5 + $0x30] sm:$0xf]
    %v471 = vld [vmem:[#allocation5 + $0x34] sm:$0xf]
    %v472 = vld [vmem:[#allocation5 + $0x38] sm:$0xf]
    %v473 = vld [vmem:[#allocation5 + $0x3c] sm:$0xf]
    %v474 = vld [vmem:[%s5] sm:$0x1]
    %v476 = vlaneseq
    %v477 = vshrl.u32 %v476, 7
    %v478 = vsub.s32 0, %v477
    %v479 = vrot.slane %v474, %v478
    %v497 = vunpack.c.l.b16 %v458
    %v498 = vunpack.c.l.b16 %v459
    %v499 = vunpack.c.l.b16 %v460
    %v500 = vunpack.c.l.b16 %v461
    %v501 = vunpack.c.l.b16 %v462
    %v502 = vunpack.c.l.b16 %v463
    %v503 = vunpack.c.l.b16 %v464
    %v504 = vunpack.c.l.b16 %v465
    %v505 = vunpack.c.l.b16 %v466
    %v506 = vunpack.c.l.b16 %v467
    %v507 = vunpack.c.l.b16 %v468
    %v508 = vunpack.c.l.b16 %v469
    %v509 = vunpack.c.l.b16 %v470
    %v510 = vunpack.c.l.b16 %v471
    %v511 = vunpack.c.l.b16 %v472
    %v512 = vunpack.c.l.b16 %v473
    %v513 = vpack.c.b16 %v498, %v497
    %v514 = vpack.c.b16 %v500, %v499
    %v515 = vpack.c.b16 %v502, %v501
    %v516 = vpack.c.b16 %v504, %v503
    %v517 = vpack.c.b16 %v506, %v505
    %v518 = vpack.c.b16 %v508, %v507
    %v519 = vpack.c.b16 %v510, %v509
    %v520 = vpack.c.b16 %v512, %v511
    %529 = vmatprep.subr.bf16.mxu0 0
    %530 = vmatpush1.bf16.msra.mxu0 %v513
    %531 = vmatprep.subr.bf16.mxu0 0
    %532 = vmatpush1.bf16.msra.mxu0 %v514
    %533 = vmatprep.subr.bf16.mxu0 0
    %534 = vmatpush1.bf16.msra.mxu0 %v515
    %535 = vmatprep.subr.bf16.mxu0 0
    %536 = vmatpush1.bf16.msra.mxu0 %v516
    %537 = vmatprep.subr.bf16.mxu0 0
    %538 = vmatpush1.bf16.msra.mxu0 %v517
    %539 = vmatprep.subr.bf16.mxu0 0
    %540 = vmatpush1.bf16.msra.mxu0 %v518
    %541 = vmatprep.subr.bf16.mxu0 0
    %542 = vmatpush1.bf16.msra.mxu0 %v519
    %543 = vmatprep.subr.bf16.mxu0 0
    %544 = vmatpush1.bf16.msra.mxu0 %v520
    %545 = vmatprep.subr.bf16.mxu0 0
    %546 = vmatpush1.bf16.msra.mxu0 0
    %547 = vmatprep.subr.bf16.mxu0 0
    %548 = vmatpush1.bf16.msra.mxu0 0
    %549 = vmatprep.subr.bf16.mxu0 0
    %550 = vmatpush1.bf16.msra.mxu0 0
    %551 = vmatprep.subr.bf16.mxu0 0
    %552 = vmatpush1.bf16.msra.mxu0 0
    %553 = vmatprep.subr.bf16.mxu0 0
    %554 = vmatpush1.bf16.msra.mxu0 0
    %555 = vmatprep.subr.bf16.mxu0 0
    %556 = vmatpush1.bf16.msra.mxu0 0
    %557 = vmatprep.subr.bf16.mxu0 0
    %558 = vmatpush1.bf16.msra.mxu0 0
    %559 = vmatprep.subr.bf16.mxu0 0
    %560 = vmatpush1.bf16.msra.mxu0 0
    %561 = vmatprep.mubr.bf16.mxu0 0
    %562 = vmatmul.mubr.bf16.gmra.mrb[0].mxu0 %v457
    %v563 = vpop.f32.mrb[0].mxu0
    %v564 = vadd.f32 %v479, %v563
    %v565 = vpop.f32.mrb[0].mxu0
    %v566 = vpop.f32.mrb[0].mxu0
    %v567 = vpop.f32.mrb[0].mxu0
    %568 = vdwg.mxu0
    %569 = vst [vmem:[#allocation7] sm:$0xff] %v564
    // Predicated region
    $region34: #{tpu_custom_call.1} parent=1 // pred_check
      _
    $region35: #{tpu_custom_call.1} parent=1 // pred_check_branch
      %571 = sbr.rel (0) target = $region37
    $region36: #{tpu_custom_call.1} parent=1 // pred_region
      %s573 = ssub.s32 128, 128
      %574 = vsyncadd [#allocation4], %s573
      %s576 = sshll.u32 [#allocation7], 4
      %s577 = int_to_ptr.vmem [resolvable:$true] %s576
      %579 = dma.vmem_to_hbm [thread:$0]  %s577, 128, %s6, [#allocation4]
    $region37: #{tpu_custom_call.1} parent=1 // pred_fallthru
      _
    // Predicated region
    $region38: #{tpu_custom_call.1} parent=1 // pred_check
      _
    $region39: #{tpu_custom_call.1} parent=1 // pred_check_branch
      %581 = sbr.rel (0) target = $region41
    $region40: #{tpu_custom_call.1} parent=1 // pred_region
      %582 = dma.done [#allocation4], 128
    $region41: #{tpu_custom_call.1} parent=1 // pred_fallthru
      _
    %583 = vsyncpa [#allocation3], 1
    %584 = vsyncpa [#allocation6], 1
    %585 = vsyncpa [#allocation4], 1

</llo_original>
